<compile_context>
chip_gen: v7x
topology: tpu7x:2x2x1
jax: 0.10.0
libtpu: 0.0.40
codegen_flags: <defaults>
</compile_context>

<pallas_src>
import jax
import jax.numpy as jnp
from jax.experimental import pallas as pl
from jax.experimental.pallas import tpu as pltpu

NUM_LAYERS = 3  # len(layer_list)


def _round_up(x, m):
    return ((x + m - 1) // m) * m


def _vmem_limit(needed_bytes):
    # Explicit scoped-VMEM limit with headroom (v5e default is only 16 MiB),
    # clipped to 64 MiB = v7x physical VMEM per TensorCore.
    return int(min(max(int(needed_bytes * 1.5) + (2 << 20), 32 << 20), 64 << 20))


# --------------- resident-weight path: W is DMA'd exactly once ---------------

def _mix_resident_kernel(x_ref, w_ref, b_ref, o_ref):
    # x_ref : VMEM (tm, K)   input row tile (ragged last tile handled by Pallas)
    # w_ref : VMEM (K,  N)   fully-resident pre-mixed weight (constant index map)
    # b_ref : VMEM (1,  N)   fully-resident pre-mixed bias (f32)
    # o_ref : VMEM (tm, N)   output tile
    y = jnp.dot(x_ref[...], w_ref[...], preferred_element_type=jnp.float32)
    o_ref[...] = (y + b_ref[...]).astype(o_ref.dtype)


def _mix_resident(x, w_mix, b_mix, out_dtype, tm_eff, vmem_limit_bytes):
    M, K = x.shape
    _, N = w_mix.shape
    grid = (pl.cdiv(M, tm_eff),)
    return pl.pallas_call(
        _mix_resident_kernel,
        out_shape=jax.ShapeDtypeStruct((M, N), out_dtype),
        grid_spec=pltpu.PrefetchScalarGridSpec(
            num_scalar_prefetch=0,
            grid=grid,
            in_specs=[
                pl.BlockSpec((tm_eff, K), lambda i: (i, 0)),
                pl.BlockSpec((K, N), lambda i: (0, 0)),   # resident: DMA'd once
                pl.BlockSpec((1, N), lambda i: (0, 0)),   # resident bias
            ],
            out_specs=pl.BlockSpec((tm_eff, N), lambda i: (i, 0)),
        ),
        compiler_params=pltpu.CompilerParams(
            dimension_semantics=("parallel",),
            vmem_limit_bytes=vmem_limit_bytes),
    )(x, w_mix, b_mix)


# ---------------- tiled fallback: K-split with f32 accumulator ---------------

def _mix_tiled_kernel(x_ref, w_ref, b_ref, o_ref, acc_ref):
    k = pl.program_id(2)

    @pl.when(k == 0)
    def _():
        acc_ref[...] = jnp.zeros_like(acc_ref)

    acc_ref[...] += jnp.dot(x_ref[...], w_ref[...],
                            preferred_element_type=jnp.float32)

    @pl.when(k == pl.num_programs(2) - 1)
    def _():
        o_ref[...] = (acc_ref[...] + b_ref[...]).astype(o_ref.dtype)


def _mix_tiled(x, w_mix, b_mix, out_dtype, tm, tn, tk):
    M, K = x.shape
    _, N = w_mix.shape
    tm_eff = min(tm, _round_up(M, 8))
    tn_eff = min(tn, _round_up(N, 128))
    tk_eff = min(tk, _round_up(K, 128))

    # Only K needs host padding: garbage in an out-of-bounds K tile would
    # corrupt valid outputs.  Ragged M / N last tiles are handled by masked
    # output writes, so no pad / slice of x or the output is needed.
    Kp = _round_up(K, tk_eff)
    if Kp != K:
        x = jnp.pad(x, ((0, 0), (0, Kp - K)))
        w_mix = jnp.pad(w_mix, ((0, Kp - K), (0, 0)))

    bpe = jnp.dtype(x.dtype).itemsize
    needed = (2 * (tm_eff * tk_eff + tk_eff * tn_eff + tm_eff * tn_eff) * bpe
              + tm_eff * tn_eff * 4 + 2 * tn_eff * 4)

    grid = (pl.cdiv(M, tm_eff), pl.cdiv(N, tn_eff), Kp // tk_eff)
    return pl.pallas_call(
        _mix_tiled_kernel,
        out_shape=jax.ShapeDtypeStruct((M, N), out_dtype),
        grid_spec=pltpu.PrefetchScalarGridSpec(
            num_scalar_prefetch=0,
            grid=grid,
            in_specs=[
                pl.BlockSpec((tm_eff, tk_eff), lambda i, j, k: (i, k)),
                pl.BlockSpec((tk_eff, tn_eff), lambda i, j, k: (k, j)),
                pl.BlockSpec((1, tn_eff), lambda i, j, k: (0, j)),
            ],
            out_specs=pl.BlockSpec((tm_eff, tn_eff), lambda i, j, k: (i, j)),
            scratch_shapes=[pltpu.VMEM((tm_eff, tn_eff), jnp.float32)],
        ),
        compiler_params=pltpu.CompilerParams(
            dimension_semantics=("parallel", "parallel", "arbitrary"),
            vmem_limit_bytes=_vmem_limit(needed)),
    )(x, w_mix, b_mix)


# --------------------------------- wrapper ----------------------------------

def mix_layer_forward(x, weights, biases, model_weight, *,
                      tm=512, tn=256, tk=512,
                      compute_dtype=jnp.bfloat16,
                      resident_budget_bytes=24 << 20,
                      force_tiled=False):
    """MixLayer forward.

    x            : (M, H_in)
    weights      : (L, H_in, H_out)   (pre-transposed; y_l = x @ W[l] + b[l])
    biases       : (L, H_out)
    model_weight : (L,)

    On v5e prefer tn=128 (128-wide MXU); on v6e/v7x keep tn=256 and bf16.
    """
    M, H_in = x.shape
    L, H_in_w, H_out = weights.shape
    assert L == NUM_LAYERS and H_in_w == H_in
    out_dtype = x.dtype

    # ---- plain-JAX glue: tiny softmax + exact linear fold of the mixture ----
    # (exact ONLY because the mixed sub-layers are pure nn.Linear)
    wsm = jax.nn.softmax(model_weight.astype(jnp.float32))               # (L,)
    w_mix = jnp.einsum('l,lkn->kn', wsm, weights.astype(jnp.float32))    # (H_in, H_out)
    b_mix = jnp.einsum('l,ln->n', wsm, biases.astype(jnp.float32))       # (H_out,)
    b_mix = b_mix.reshape(1, H_out)                                      # keep f32

    x_c = x.astype(compute_dtype)
    w_c = w_mix.astype(compute_dtype)

    bpe = jnp.dtype(compute_dtype).itemsize
    tm_eff = min(tm, _round_up(M, 8))
    # Conservative double-buffered budget for the resident path (also covers
    # the per-TC duplication when megacore shards the M axis on v7x).
    resident_bytes = (2 * (tm_eff * H_in + H_in * H_out + tm_eff * H_out) * bpe
                      + 2 * H_out * 4)

    if (not force_tiled) and resident_bytes <= resident_budget_bytes:
        return _mix_resident(x_c, w_c, b_mix, out_dtype, tm_eff,
                             _vmem_limit(resident_bytes))
    return _mix_tiled(x_c, w_c, b_mix, out_dtype, tm, tn, tk)


if __name__ == "__main__":
    key = jax.random.PRNGKey(0)
    B, S, H = 2, 8, 32           # batch=2, seq=8, hidden=32
    M = B * S
    kx, kw, kb, km = jax.random.split(key, 4)

    x = jax.random.normal(kx, (B, S, H), jnp.float32)
    # PyTorch nn.Linear stores weight as (H_out, H_in); init in that layout
    # then pre-transpose for the kernel.
    w_pt = 0.05 * jax.random.normal(kw, (NUM_LAYERS, H, H), jnp.float32)
    b = 0.05 * jax.random.normal(kb, (NUM_LAYERS, H), jnp.float32)
    model_weight = jax.random.normal(km, (NUM_LAYERS,), jnp.float32)

    w = jnp.transpose(w_pt, (0, 2, 1))  # (L, H_in, H_out)

    # Pure-JAX reference of MixLayer.forward (per-layer, then weighted sum).
    wsm = jax.nn.softmax(model_weight)
    layer_outs = jnp.stack(
        [x @ w[l] + b[l] for l in range(NUM_LAYERS)], axis=0)  # (L, B, S, H)
    ref = jnp.sum(layer_outs * wsm[:, None, None, None], axis=0)

    # 1) Default path: bf16 compute, weight-resident kernel.
    out_bf16 = mix_layer_forward(x.reshape(M, H), w, b, model_weight)
    out_bf16 = out_bf16.reshape(B, S, H)
    jax.block_until_ready(out_bf16)
    assert jnp.allclose(out_bf16, ref, atol=3e-2, rtol=3e-2), \
        "bf16 mismatch vs reference"

    # 2) f32 compute, weight-resident kernel — exact check.
    out_f32 = mix_layer_forward(x.reshape(M, H), w, b, model_weight,
                                compute_dtype=jnp.float32).reshape(B, S, H)
    jax.block_until_ready(out_f32)
    assert jnp.allclose(out_f32, ref, atol=1e-5, rtol=1e-5), \
        "f32 resident mismatch vs reference"

    # 3) Force the K-split tiled fallback (large-shape / v7x path) — exact check.
    out_tiled = mix_layer_forward(x.reshape(M, H), w, b, model_weight,
                                  compute_dtype=jnp.float32,
                                  force_tiled=True).reshape(B, S, H)
    jax.block_until_ready(out_tiled)
    assert jnp.allclose(out_tiled, ref, atol=1e-5, rtol=1e-5), \
        "tiled mismatch vs reference"

    print("KERNEL_OK")
</pallas_src>

<mosaic_0001>
module attributes {stable_mosaic.version = 11 : i64} {
  func.func @_mix_resident_kernel(%arg0: i32, %arg1: memref<16x32xbf16, #tpu.memory_space<vmem>>, %arg2: memref<32x32xbf16, #tpu.memory_space<vmem>>, %arg3: memref<1x32xf32, #tpu.memory_space<vmem>>, %arg4: memref<16x32xf32, #tpu.memory_space<vmem>>) attributes {dimension_semantics = [#tpu.dimension_semantics<parallel>], iteration_bounds = array<i64: 1>, scalar_prefetch = 0 : i64, scratch_operands = 0 : i64, tpu.core_type = #tpu.core_type<tc>, window_params = [{transform_indices = @transform_0, window_bounds = array<i64: 16, 32>}, {pipeline_mode = #tpu.pipeline_mode<synchronous>, transform_indices = @transform_1, window_bounds = array<i64: 32, 32>}, {pipeline_mode = #tpu.pipeline_mode<synchronous>, transform_indices = @transform_2, window_bounds = array<i64: 1, 32>}, {transform_indices = @transform_3, window_bounds = array<i64: 16, 32>}]} {
    %c0 = arith.constant 0 : index
    %c0_0 = arith.constant 0 : index
    %0 = vector.load %arg1[%c0, %c0_0] : memref<16x32xbf16, #tpu.memory_space<vmem>>, vector<16x32xbf16>
    %c0_1 = arith.constant 0 : index
    %c0_2 = arith.constant 0 : index
    %1 = vector.load %arg2[%c0_1, %c0_2] : memref<32x32xbf16, #tpu.memory_space<vmem>>, vector<32x32xbf16>
    %cst = arith.constant dense<0.000000e+00> : vector<16x32xf32>
    %2 = tpu.matmul %0, %1, %cst {dimension_numbers = #tpu.dot_dimension_numbers<[1], [0], [0], [1], [0, 0, 1, 1], [], []>} : vector<16x32xbf16>, vector<32x32xbf16>, vector<16x32xf32> -> vector<16x32xf32>
    %c0_3 = arith.constant 0 : index
    %c0_4 = arith.constant 0 : index
    %3 = vector.load %arg3[%c0_3, %c0_4] : memref<1x32xf32, #tpu.memory_space<vmem>>, vector<1x32xf32>
    %4 = vector.broadcast %3 : vector<1x32xf32> to vector<16x32xf32>
    %5 = arith.addf %2, %4 : vector<16x32xf32>
    %c0_5 = arith.constant 0 : index
    %c0_6 = arith.constant 0 : index
    %6 = vector.load %arg4[%c0_5, %c0_6] : memref<16x32xf32, #tpu.memory_space<vmem>>, vector<16x32xf32>
    tpu.vector_store %arg4[%c0_5, %c0_6], %5 {strides = array<i32>} : memref<16x32xf32, #tpu.memory_space<vmem>>, vector<16x32xf32>,
    return
  }
  func.func @transform_0(%arg0: i32) -> (i32, i32) {
    %c0_i32 = arith.constant 0 : i32
    %c0_i32_0 = arith.constant 0 : i32
    return %arg0, %c0_i32 : i32, i32
  }
  func.func @transform_1(%arg0: i32) -> (i32, i32) {
    %c0_i32 = arith.constant 0 : i32
    %c0_i32_0 = arith.constant 0 : i32
    %c0_i32_1 = arith.constant 0 : i32
    return %c0_i32, %c0_i32_0 : i32, i32
  }
  func.func @transform_2(%arg0: i32) -> (i32, i32) {
    %c0_i32 = arith.constant 0 : i32
    %c0_i32_0 = arith.constant 0 : i32
    %c0_i32_1 = arith.constant 0 : i32
    return %c0_i32, %c0_i32_0 : i32, i32
  }
  func.func @transform_3(%arg0: i32) -> (i32, i32) {
    %c0_i32 = arith.constant 0 : i32
    %c0_i32_0 = arith.constant 0 : i32
    return %arg0, %c0_i32 : i32, i32
  }
}

</mosaic_0001>

<llo_original>
// kernel: tpu_custom_call.1
$region0: #{tpu_custom_call.1}
  #allocation0 [shape = 'u32[]', space=smem, size = 0x4, offset = 0x4, fixed_abs, tag = 'smem constant byte address 0x4 - core index']
  #allocation1 [shape = 'u32[144,128]{1,0:T(1,128)}', space=vmem, size = 0x12000, scoped, tag = 'internal scratch']
  %s0 = inlined_call_operand.hbm [shape: bf16[16,32], index: 0, kind: input, shape index: {}]
  %s1 = inlined_call_operand.hbm [shape: bf16[32,32], index: 1, kind: input, shape index: {}]
  %s2 = inlined_call_operand.vmem [shape: f32[1,32], index: 2, kind: input, shape index: {}]
  %s3 = inlined_call_operand.hbm [shape: f32[16,32], index: 3, kind: output, shape index: {}]
  %s4 = sld [smem:[#allocation0]]
  $region30: #{tpu_custom_call.1} parent=0
    _
  %s6 = ssub.s32 1, %s4
  %s7 = scalar_select 0, %s6, %s4
  $region1: #{tpu_custom_call.1} parent=0
    #allocation2 [shape = 'u8[4096]{0}', space=vmem, size = 0x1000, scoped, tag = 'input window, operand 0, single buffered']
    #allocation3 [shape = 's32[1]{0}', space=sflag, size = 0x4, scoped, tag = 'scoped memory for tpu_custom_call.1']
    #allocation4 [shape = 's32[1]{0}', space=sflag, size = 0x4, scoped, tag = 'scoped memory for tpu_custom_call.1']
    #allocation5 [shape = 'u8[8192]{0}', space=vmem, size = 0x2000, scoped, tag = 'input window, operand 1, single buffered']
    #allocation6 [shape = 's32[1]{0}', space=sflag, size = 0x4, scoped, tag = 'scoped memory for tpu_custom_call.1']
    #allocation7 [shape = 'u8[8192]{0}', space=vmem, size = 0x2000, scoped, tag = 'output window, operand 0, single buffered']
    %8 = vsyncpa [#allocation3], 0
    %9 = vsyncpa [#allocation6], 0
    %10 = vsyncpa [#allocation4], 0
    // Predicated region
    $region2: #{tpu_custom_call.1} parent=1 // pred_check
      _
    $region3: #{tpu_custom_call.1} parent=1 // pred_check_branch
      %12 = sbr.rel (0) target = $region5
    $region4: #{tpu_custom_call.1} parent=1 // pred_region
      %s14 = ssub.s32 128, 128
      %15 = vsyncadd [#allocation3], %s14
      %s16 = sshll.u32 [#allocation2], 4
      %s17 = int_to_ptr.vmem [resolvable:$true] %s16
      %22 = dma.hbm_to_vmem [thread:$0]  %s0, 128, %s17, [#allocation3], 64, 64, 4
    $region5: #{tpu_custom_call.1} parent=1 // pred_fallthru
      _
    // Predicated region
    $region6: #{tpu_custom_call.1} parent=1 // pred_check
      _
    $region7: #{tpu_custom_call.1} parent=1 // pred_check_branch
      %24 = sbr.rel (0) target = $region9
    $region8: #{tpu_custom_call.1} parent=1 // pred_region
      %s26 = ssub.s32 256, 256
      %27 = vsyncadd [#allocation6], %s26
      %s28 = sshll.u32 [#allocation5], 4
      %s29 = int_to_ptr.vmem [resolvable:$true] %s28
      %34 = dma.hbm_to_vmem [thread:$0]  %s1, 256, %s29, [#allocation6], 64, 64, 4
    $region9: #{tpu_custom_call.1} parent=1 // pred_fallthru
      _
    // Predicated region
    $region10: #{tpu_custom_call.1} parent=1 // pred_check
      _
    $region11: #{tpu_custom_call.1} parent=1 // pred_check_branch
      %36 = sbr.rel (0) target = $region13
    $region12: #{tpu_custom_call.1} parent=1 // pred_region
      _
    $region13: #{tpu_custom_call.1} parent=1 // pred_fallthru
      _
    // Predicated region
    $region14: #{tpu_custom_call.1} parent=1 // pred_check
      _
    $region15: #{tpu_custom_call.1} parent=1 // pred_check_branch
      %38 = sbr.rel (0) target = $region17
    $region16: #{tpu_custom_call.1} parent=1 // pred_region
      %39 = dma.done [#allocation3], 128
    $region17: #{tpu_custom_call.1} parent=1 // pred_fallthru
      _
    // Predicated region
    $region18: #{tpu_custom_call.1} parent=1 // pred_check
      _
    $region19: #{tpu_custom_call.1} parent=1 // pred_check_branch
      %41 = sbr.rel (0) target = $region21
    $region20: #{tpu_custom_call.1} parent=1 // pred_region
      %42 = dma.done [#allocation6], 256
    $region21: #{tpu_custom_call.1} parent=1 // pred_fallthru
      _
    %v44 = vld [vmem:[#allocation2] sm:$0xf]
    %v45 = vld [vmem:[#allocation2 + $0x4] sm:$0xf]
    %v46 = vld [vmem:[#allocation5] sm:$0xf]
    %v47 = vld [vmem:[#allocation5 + $0x4] sm:$0xf]
    %v48 = vld [vmem:[#allocation5 + $0x8] sm:$0xf]
    %v49 = vld [vmem:[#allocation5 + $0xc] sm:$0xf]
    %v50 = vld [vmem:[%s2] sm:$0x1]
    %v52 = vlaneseq
    %v53 = vshrl.u32 %v52, 7
    %v54 = vsub.s32 0, %v53
    %v55 = vrot.slane %v50, %v54
    %v59 = vunpack.c.l.b16 %v44
    %v60 = vunpack.c.l.b16 %v45
    %v61 = vpack.c.b16 %v60, %v59
    %v66 = vunpack.c.l.b16 %v46
    %v67 = vunpack.c.l.b16 %v47
    %v68 = vunpack.c.l.b16 %v48
    %v69 = vunpack.c.l.b16 %v49
    %v70 = vpack.c.b16 %v67, %v66
    %v71 = vpack.c.b16 %v69, %v68
    %vm74 = vcmask 261120
    %v76 = vsel %vm74, %v61, 0
    %78 = vmatprep.subr.bf16.mxu0 0
    %79 = vmatpush1.bf16.msra.mxu0 %v70
    %80 = vmatprep.subr.bf16.mxu0 0
    %81 = vmatpush1.bf16.msra.mxu0 %v71
    %82 = vmatprep.subr.bf16.mxu0 0
    %83 = vmatpush1.bf16.msra.mxu0 0
    %84 = vmatprep.subr.bf16.mxu0 0
    %85 = vmatpush1.bf16.msra.mxu0 0
    %86 = vmatprep.subr.bf16.mxu0 0
    %87 = vmatpush1.bf16.msra.mxu0 0
    %88 = vmatprep.subr.bf16.mxu0 0
    %89 = vmatpush1.bf16.msra.mxu0 0
    %90 = vmatprep.subr.bf16.mxu0 0
    %91 = vmatpush1.bf16.msra.mxu0 0
    %92 = vmatprep.subr.bf16.mxu0 0
    %93 = vmatpush1.bf16.msra.mxu0 0
    %94 = vmatprep.subr.bf16.mxu0 0
    %95 = vmatpush1.bf16.msra.mxu0 0
    %96 = vmatprep.subr.bf16.mxu0 0
    %97 = vmatpush1.bf16.msra.mxu0 0
    %98 = vmatprep.subr.bf16.mxu0 0
    %99 = vmatpush1.bf16.msra.mxu0 0
    %100 = vmatprep.subr.bf16.mxu0 0
    %101 = vmatpush1.bf16.msra.mxu0 0
    %102 = vmatprep.subr.bf16.mxu0 0
    %103 = vmatpush1.bf16.msra.mxu0 0
    %104 = vmatprep.subr.bf16.mxu0 0
    %105 = vmatpush1.bf16.msra.mxu0 0
    %106 = vmatprep.subr.bf16.mxu0 0
    %107 = vmatpush1.bf16.msra.mxu0 0
    %108 = vmatprep.subr.bf16.mxu0 0
    %109 = vmatpush1.bf16.msra.mxu0 0
    %110 = vmatprep.mubr.bf16.mxu0 0
    %111 = vmatmul.mubr.bf16.gmra.mrb[0].mxu0 %v76
    %v112 = vpop.f32.mrb[0].mxu0
    %v113 = vadd.f32 %v55, %v112
    %v114 = vpop.f32.mrb[0].mxu0
    %v115 = vpop.f32.mrb[0].mxu0
    %v116 = vadd.f32 %v55, %v115
    %v117 = vpop.f32.mrb[0].mxu0
    %118 = vdwg.mxu0
    %119 = vst.msk [vmem:[#allocation7] sm:$0xff] %vm74, %v113
    %120 = vst.msk [vmem:[#allocation7 + $0x8] sm:$0xff] %vm74, %v116
    // Predicated region
    $region22: #{tpu_custom_call.1} parent=1 // pred_check
      _
    $region23: #{tpu_custom_call.1} parent=1 // pred_check_branch
      %122 = sbr.rel (0) target = $region25
    $region24: #{tpu_custom_call.1} parent=1 // pred_region
      %s124 = ssub.s32 256, 256
      %125 = vsyncadd [#allocation4], %s124
      %s126 = sshll.u32 [#allocation7], 4
      %s127 = int_to_ptr.vmem [resolvable:$true] %s126
      %132 = dma.vmem_to_hbm [thread:$0]  %s127, 256, %s3, [#allocation4], 128, 128, 8
    $region25: #{tpu_custom_call.1} parent=1 // pred_fallthru
      _
    // Predicated region
    $region26: #{tpu_custom_call.1} parent=1 // pred_check
      _
    $region27: #{tpu_custom_call.1} parent=1 // pred_check_branch
      %134 = sbr.rel (0) target = $region29
    $region28: #{tpu_custom_call.1} parent=1 // pred_region
      %135 = dma.done [#allocation4], 256
    $region29: #{tpu_custom_call.1} parent=1 // pred_fallthru
      _
    %136 = vsyncpa [#allocation3], 1
    %137 = vsyncpa [#allocation6], 1
    %138 = vsyncpa [#allocation4], 1

</llo_original>
